<compile_context>
chip_gen: v7x
topology: tpu7x:2x2x1
jax: 0.10.0
libtpu: 0.0.40
codegen_flags: <defaults>
</compile_context>

<pallas_src>
import functools

import jax
import jax.numpy as jnp
from jax.experimental import pallas as pl
from jax.experimental.pallas import tpu as pltpu

_LANE = 128
_SUBLANE = 8


def _round_up(x, m):
    return ((x + m - 1) // m) * m


def _cdiv(a, b):
    return (a + b - 1) // b


def _pad2d(x, rows, cols):
    """Zero-pad a 2D array to (rows, cols); no copy if already that shape."""
    r, c = x.shape
    if r == rows and c == cols:
        return x
    return jnp.zeros((rows, cols), x.dtype).at[:r, :c].set(x)


# -----------------------------------------------------------------------------
# Kernels
# -----------------------------------------------------------------------------
def _decoder_kernel(z_ref, w1_ref, b1_ref, w2_ref, b2_ref, out_ref, h_ref):
    """Cached-activation kernel.  grid = (batch tiles, output-column tiles).

    fc1 depends only on the batch tile, so it is computed once per batch tile
    (at j == 0), bias+ReLU'd in f32, cast once to the MXU dtype and cached in
    VMEM; every output-column tile then reuses it for fc2.
    NOTE: relies on the j axis iterating innermost & sequentially ("arbitrary")
    for each i -- do not reorder grid axes or mark j "parallel".
    """
    @pl.when(pl.program_id(1) == 0)
    def _():
        h = jnp.dot(z_ref[...], w1_ref[...], preferred_element_type=jnp.float32)
        h_ref[...] = jnp.maximum(h + b1_ref[...], 0.0).astype(h_ref.dtype)

    x = jnp.dot(h_ref[...], w2_ref[...], preferred_element_type=jnp.float32)
    out_ref[...] = (x + b2_ref[...]).astype(out_ref.dtype)


def _decoder_kernel_ktiled(z_ref, w1_ref, b1_ref, w2_ref, b2_ref, out_ref,
                           acc_ref):
    """Hidden-dim (K) tiled fallback for large hidden dims.

    grid = (batch tiles, output-column tiles, hidden tiles), hidden innermost.
    fc1 is computed per hidden chunk and immediately consumed by fc2, which
    accumulates into a (tm, tn) f32 scratch; VMEM stays bounded for any H.
    """
    k = pl.program_id(2)

    @pl.when(k == 0)
    def _():
        acc_ref[...] = jnp.zeros_like(acc_ref)

    h = jnp.dot(z_ref[...], w1_ref[...], preferred_element_type=jnp.float32)
    h = jnp.maximum(h + b1_ref[...], 0.0).astype(w2_ref.dtype)
    acc_ref[...] += jnp.dot(h, w2_ref[...], preferred_element_type=jnp.float32)

    @pl.when(k == pl.num_programs(2) - 1)
    def _():
        out_ref[...] = (acc_ref[...] + b2_ref[...]).astype(out_ref.dtype)


# -----------------------------------------------------------------------------
# Host-side wrappers
# -----------------------------------------------------------------------------
def prepare_decoder_params(w1_t, b1, w2_t, b2, *, mxu_dtype=jnp.bfloat16):
    """One-time padding / casting of the decoder weights (do NOT redo per call).

    w1_t : (latent_dim, hidden_dim)  -- fc1 weight already in (in, out) layout
    b1   : (hidden_dim,) or (1, hidden_dim)
    w2_t : (hidden_dim, input_dim)
    b2   : (input_dim,) or (1, input_dim)

    Feature axes are zero-padded to multiples of 128 (lane-dense; numerically
    exact).  MXU operands are cast to `mxu_dtype` (default bf16 on all current
    generations); accumulation inside the kernel is always f32 and biases stay
    f32.  Returns (params_dict, input_dim).
    """
    L, H = w1_t.shape
    H2, D = w2_t.shape
    assert H2 == H, "fc1 output dim must equal fc2 input dim"
    Lp = _round_up(L, _LANE)
    Hp = _round_up(H, _LANE)
    Dp = _round_up(D, _LANE)
    params = dict(
        w1=_pad2d(w1_t.astype(mxu_dtype), Lp, Hp),
        b1=_pad2d(b1.reshape(1, -1).astype(jnp.float32), 1, Hp),
        w2=_pad2d(w2_t.astype(mxu_dtype), Hp, Dp),
        b2=_pad2d(b2.reshape(1, -1).astype(jnp.float32), 1, Dp),
    )
    return params, D


def _vmem_budget_bytes():
    """Generation-aware tile budget (plus physical capacity) in bytes."""
    cap = 64 * 1024 * 1024
    try:
        info = pltpu.get_tpu_info()
        cap = int(getattr(info, "vmem_capacity_bytes", cap))
    except Exception:
        pass
    if cap >= 100 * 1024 * 1024:        # v5e / v6e: 128 MiB physical
        return 80 * 1024 * 1024, cap
    return 28 * 1024 * 1024, cap        # v7x: 64 MiB physical


@functools.partial(jax.jit, static_argnames=("out_dim", "force_budget_bytes"))
def decoder_forward(z, params, *, out_dim, force_budget_bytes=None):
    """Fused decoder forward: relu(z @ w1 + b1) @ w2 + b2.

    z: (B, latent_dim).  `params` from prepare_decoder_params.  `out_dim` is
    the original (unpadded) input_dim.  `force_budget_bytes` is for testing the
    hidden-dim-tiled fallback only.
    """
    w1p, b1p, w2p, b2p = params["w1"], params["b1"], params["w2"], params["b2"]
    out_dtype = z.dtype
    B, L = z.shape
    Lp, Hp = w1p.shape
    Dp = w2p.shape[1]
    mxu_dtype = w1p.dtype
    in_bytes = jnp.dtype(mxu_dtype).itemsize
    out_bytes = jnp.dtype(out_dtype).itemsize

    budget, vmem_cap = _vmem_budget_bytes()
    if force_budget_bytes is not None:
        budget = int(force_budget_bytes)

    # --- batch tiling: balanced tiles (avoid over-padding B just past a tile
    # boundary); >= 2 tiles for big batches so both v7x TensorCores get work.
    n_i = _cdiv(B, 512)
    if n_i == 1 and B >= 512:
        n_i = 2
    tm = min(_round_up(_cdiv(B, n_i), _SUBLANE), 512)

    def col_tile(cap_):
        if Dp <= cap_:
            return Dp
        return max((cap_ // 256) * 256, _LANE)

    # Try a fully VMEM-resident w2 first (grid_j == 1 -> never re-streamed).
    tn = Dp

    def footprint(tm_, tn_):
        return (2 * tm_ * Lp * in_bytes        # z tile (double-buffered)
                + Lp * Hp * in_bytes           # w1 (resident, single-buffered)
                + Hp * 4                       # b1 (resident, single-buffered)
                + 2 * Hp * tn_ * in_bytes      # w2 column tile
                + 2 * tn_ * 4                  # b2 column tile
                + 2 * tm_ * tn_ * out_bytes    # out tile
                + tm_ * Hp * in_bytes          # cached fc1 act (mxu dtype)
                + tm_ * Hp * 4                 # f32 fc1 temp (j == 0 only)
                + tm_ * tn_ * 4)               # f32 fc2 temp

    # Shrink order: tn -> 256, then tm -> 256, then tn -> 128, then tm -> 8.
    if footprint(tm, tn) > budget:
        tn = col_tile(512)
    while footprint(tm, tn) > budget and tn > 256:
        tn = max(256, _round_up(tn // 2, 256))
    tm_floor = min(tm, 256)
    while footprint(tm, tn) > budget and tm > tm_floor:
        tm = max(tm_floor, _round_up(tm // 2, _SUBLANE))
    while footprint(tm, tn) > budget and tn > _LANE:
        tn = max(_LANE, _round_up(tn // 2, _LANE))
    while footprint(tm, tn) > budget and tm > _SUBLANE:
        tm = max(_SUBLANE, _round_up(tm // 2, _SUBLANE))

    use_ktiled = footprint(tm, tn) > budget

    n_i = _cdiv(B, tm)
    Bp = n_i * tm
    zp = _pad2d(z.astype(mxu_dtype), Bp, Lp)

    flops = 2 * Bp * (Lp * Hp + Hp * Dp)
    bytes_accessed = int(zp.size * in_bytes + w1p.size * in_bytes
                         + w2p.size * in_bytes + b1p.size * 4 + b2p.size * 4
                         + Bp * Dp * out_bytes)

    if not use_ktiled:
        fp = footprint(tm, tn)
        vmem_limit = int(min(max(vmem_cap - 16 * 1024 * 1024, 32 * 1024 * 1024),
                             max(2 * fp, 32 * 1024 * 1024)))
        grid = (n_i, _cdiv(Dp, tn))
        out_padded = pl.pallas_call(
            _decoder_kernel,
            out_shape=jax.ShapeDtypeStruct((Bp, Dp), out_dtype),
            grid_spec=pltpu.PrefetchScalarGridSpec(
                num_scalar_prefetch=0,
                grid=grid,
                in_specs=[
                    pl.BlockSpec((tm, Lp), lambda i, j: (i, 0)),
                    pl.BlockSpec((Lp, Hp), lambda i, j: (0, 0),
                                 pipeline_mode=pl.Buffered(1)),
                    pl.BlockSpec((1, Hp), lambda i, j: (0, 0),
                                 pipeline_mode=pl.Buffered(1)),
                    pl.BlockSpec((Hp, tn), lambda i, j: (0, j)),
                    pl.BlockSpec((1, tn), lambda i, j: (0, j)),
                ],
                out_specs=pl.BlockSpec((tm, tn), lambda i, j: (i, j)),
                scratch_shapes=[pltpu.VMEM((tm, Hp), mxu_dtype)],
            ),
            compiler_params=pltpu.CompilerParams(
                dimension_semantics=("parallel", "arbitrary"),
                vmem_limit_bytes=vmem_limit,
            ),
            cost_estimate=pl.CostEstimate(
                flops=flops, transcendentals=0, bytes_accessed=bytes_accessed),
        )(zp, w1p, b1p, w2p, b2p)
    else:
        # Hidden-dim tiled fallback: bounded VMEM for arbitrarily large H.
        tn = col_tile(512)
        tk = min(Hp, 512)

        def footprint_k(tm_, tn_, tk_):
            return (2 * tm_ * Lp * in_bytes       # z tile
                    + 2 * Lp * tk_ * in_bytes     # w1 hidden tile
                    + 2 * tk_ * 4                 # b1 hidden tile
                    + 2 * tk_ * tn_ * in_bytes    # w2 tile
                    + 2 * tn_ * 4                 # b2 tile
                    + 2 * tm_ * tn_ * out_bytes   # out tile
                    + tm_ * tn_ * 4               # f32 accumulator scratch
                    + tm_ * tk_ * 4               # f32 fc1 chunk temp
                    + tm_ * tk_ * in_bytes)       # cast fc1 chunk

        while footprint_k(tm, tn, tk) > budget and tk > 256:
            tk = max(256, _round_up(tk // 2, 256))
        while footprint_k(tm, tn, tk) > budget and tn > 256:
            tn = max(256, _round_up(tn // 2, 256))
        while footprint_k(tm, tn, tk) > budget and tm > 256:
            tm = max(256, _round_up(tm // 2, _SUBLANE))
        while footprint_k(tm, tn, tk) > budget and tk > _LANE:
            tk = max(_LANE, _round_up(tk // 2, _LANE))
        while footprint_k(tm, tn, tk) > budget and tn > _LANE:
            tn = max(_LANE, _round_up(tn // 2, _LANE))
        while footprint_k(tm, tn, tk) > budget and tm > _SUBLANE:
            tm = max(_SUBLANE, _round_up(tm // 2, _SUBLANE))
        # tk must divide Hp exactly: the hidden axis feeds the accumulation, so
        # an out-of-bounds edge tile would contribute unspecified data.
        while Hp % tk != 0:
            tk -= _LANE

        n_i = _cdiv(B, tm)
        Bp = n_i * tm
        zp = _pad2d(z.astype(mxu_dtype), Bp, Lp)

        fp = footprint_k(tm, tn, tk)
        vmem_limit = int(min(max(vmem_cap - 16 * 1024 * 1024, 32 * 1024 * 1024),
                             max(2 * fp, 32 * 1024 * 1024)))
        grid = (n_i, _cdiv(Dp, tn), Hp // tk)
        out_padded = pl.pallas_call(
            _decoder_kernel_ktiled,
            out_shape=jax.ShapeDtypeStruct((Bp, Dp), out_dtype),
            grid_spec=pltpu.PrefetchScalarGridSpec(
                num_scalar_prefetch=0,
                grid=grid,
                in_specs=[
                    pl.BlockSpec((tm, Lp), lambda i, j, k: (i, 0)),
                    pl.BlockSpec((Lp, tk), lambda i, j, k: (0, k)),
                    pl.BlockSpec((1, tk), lambda i, j, k: (0, k)),
                    pl.BlockSpec((tk, tn), lambda i, j, k: (k, j)),
                    pl.BlockSpec((1, tn), lambda i, j, k: (0, j)),
                ],
                out_specs=pl.BlockSpec((tm, tn), lambda i, j, k: (i, j)),
                scratch_shapes=[pltpu.VMEM((tm, tn), jnp.float32)],
            ),
            compiler_params=pltpu.CompilerParams(
                dimension_semantics=("parallel", "parallel", "arbitrary"),
                vmem_limit_bytes=vmem_limit,
            ),
            cost_estimate=pl.CostEstimate(
                flops=flops, transcendentals=0, bytes_accessed=bytes_accessed),
        )(zp, w1p, b1p, w2p, b2p)

    return out_padded[:B, :out_dim]


# -----------------------------------------------------------------------------
# Reference / init helpers
# -----------------------------------------------------------------------------
def init_decoder_params(key, latent_dim, hidden_dim, input_dim,
                        dtype=jnp.float32):
    """nn.Linear-style init (uniform +-1/sqrt(fan_in)), (in, out) layout."""
    k1, k2, k3, k4 = jax.random.split(key, 4)
    bound1 = 1.0 / jnp.sqrt(latent_dim)
    bound2 = 1.0 / jnp.sqrt(hidden_dim)
    w1_t = jax.random.uniform(k1, (latent_dim, hidden_dim), dtype, -bound1, bound1)
    b1 = jax.random.uniform(k2, (1, hidden_dim), dtype, -bound1, bound1)
    w2_t = jax.random.uniform(k3, (hidden_dim, input_dim), dtype, -bound2, bound2)
    b2 = jax.random.uniform(k4, (1, input_dim), dtype, -bound2, bound2)
    return w1_t, b1, w2_t, b2


def decoder_reference(z, w1_t, b1, w2_t, b2):
    h = jnp.maximum(z @ w1_t + b1, 0.0)
    return h @ w2_t + b2


if __name__ == "__main__":
    latent_dim, hidden_dim, input_dim, batch = 16, 32, 64, 8

    key = jax.random.PRNGKey(0)
    kz, kp = jax.random.split(key)
    z = jax.random.normal(kz, (batch, latent_dim), jnp.float32)
    w1_t, b1, w2_t, b2 = init_decoder_params(kp, latent_dim, hidden_dim, input_dim)

    ref = decoder_reference(z, w1_t, b1, w2_t, b2)

    # 1) Exact path: f32 MXU operands, tight tolerance.
    params_f32, D = prepare_decoder_params(w1_t, b1, w2_t, b2,
                                           mxu_dtype=jnp.float32)
    out = jax.block_until_ready(decoder_forward(z, params_f32, out_dim=D))
    assert out.shape == (batch, input_dim)
    assert jnp.allclose(out, ref, atol=1e-5, rtol=1e-5)

    # 2) Default fast path: bf16 MXU operands, f32 accumulation.
    params_bf16, D = prepare_decoder_params(w1_t, b1, w2_t, b2)
    out_bf16 = jax.block_until_ready(decoder_forward(z, params_bf16, out_dim=D))
    assert out_bf16.shape == (batch, input_dim)
    assert jnp.allclose(out_bf16, ref, atol=3e-2, rtol=3e-2)

    # 3) Exercise the hidden-dim (K) tiled fallback: hidden dim spanning two
    #    128-wide hidden tiles plus a forced tiny VMEM budget.
    hidden_dim2 = 200
    w1b, b1b, w2b, b2b = init_decoder_params(
        jax.random.PRNGKey(1), latent_dim, hidden_dim2, input_dim)
    ref2 = decoder_reference(z, w1b, b1b, w2b, b2b)
    params2, D2 = prepare_decoder_params(w1b, b1b, w2b, b2b,
                                         mxu_dtype=jnp.float32)
    out2 = jax.block_until_ready(
        decoder_forward(z, params2, out_dim=D2, force_budget_bytes=100 * 1024))
    assert out2.shape == (batch, input_dim)
    assert jnp.allclose(out2, ref2, atol=1e-4, rtol=1e-4)

    print("KERNEL_OK")
</pallas_src>

<mosaic_0001>
module attributes {stable_mosaic.version = 11 : i64} {
  func.func @_decoder_kernel(%arg0: i32, %arg1: i32, %arg2: memref<8x128xf32, #tpu.memory_space<vmem>>, %arg3: memref<128x128xf32, #tpu.memory_space<vmem>>, %arg4: memref<1x128xf32, #tpu.memory_space<vmem>>, %arg5: memref<128x128xf32, #tpu.memory_space<vmem>>, %arg6: memref<1x128xf32, #tpu.memory_space<vmem>>, %arg7: memref<8x128xf32, #tpu.memory_space<vmem>>, %arg8: memref<8x128xf32, #tpu.memory_space<vmem>>) attributes {dimension_semantics = [#tpu.dimension_semantics<parallel>, #tpu.dimension_semantics<arbitrary>], iteration_bounds = array<i64: 1, 1>, scalar_prefetch = 0 : i64, scratch_operands = 1 : i64, tpu.core_type = #tpu.core_type<tc>, window_params = [{transform_indices = @transform_0, window_bounds = array<i64: 8, 128>}, {pipeline_mode = #tpu.pipeline_mode<synchronous>, transform_indices = @transform_1, window_bounds = array<i64: 128, 128>}, {pipeline_mode = #tpu.pipeline_mode<synchronous>, transform_indices = @transform_2, window_bounds = array<i64: 1, 128>}, {transform_indices = @transform_3, window_bounds = array<i64: 128, 128>}, {transform_indices = @transform_4, window_bounds = array<i64: 1, 128>}, {transform_indices = @transform_5, window_bounds = array<i64: 8, 128>}]} {
    %c0_i32 = arith.constant 0 : i32
    %0 = arith.cmpi eq, %arg1, %c0_i32 : i32
    %1 = arith.extui %0 : i1 to i32
    %c0_i32_0 = arith.constant 0 : i32
    %2 = arith.cmpi ne, %1, %c0_i32_0 : i32
    scf.if %2 {
      %c0_8 = arith.constant 0 : index
      %c0_9 = arith.constant 0 : index
      %10 = vector.load %arg2[%c0_8, %c0_9] : memref<8x128xf32, #tpu.memory_space<vmem>>, vector<8x128xf32>
      %c0_10 = arith.constant 0 : index
      %c0_11 = arith.constant 0 : index
      %11 = vector.load %arg3[%c0_10, %c0_11] : memref<128x128xf32, #tpu.memory_space<vmem>>, vector<128x128xf32>
      %cst_12 = arith.constant dense<0.000000e+00> : vector<8x128xf32>
      %12 = tpu.matmul %10, %11, %cst_12 {dimension_numbers = #tpu.dot_dimension_numbers<[1], [0], [0], [1], [0, 0, 1, 1], [], []>} : vector<8x128xf32>, vector<128x128xf32>, vector<8x128xf32> -> vector<8x128xf32>
      %c0_13 = arith.constant 0 : index
      %c0_14 = arith.constant 0 : index
      %13 = vector.load %arg4[%c0_13, %c0_14] : memref<1x128xf32, #tpu.memory_space<vmem>>, vector<1x128xf32>
      %14 = vector.broadcast %13 : vector<1x128xf32> to vector<8x128xf32>
      %15 = arith.addf %12, %14 : vector<8x128xf32>
      %cst_15 = arith.constant 0.000000e+00 : f32
      %16 = vector.broadcast %cst_15 : f32 to vector<8x128xf32>
      %17 = arith.maximumf %15, %16 : vector<8x128xf32>
      %c0_16 = arith.constant 0 : index
      %c0_17 = arith.constant 0 : index
      %18 = vector.load %arg8[%c0_16, %c0_17] : memref<8x128xf32, #tpu.memory_space<vmem>>, vector<8x128xf32>
      tpu.vector_store %arg8[%c0_16, %c0_17], %17 {strides = array<i32>} : memref<8x128xf32, #tpu.memory_space<vmem>>, vector<8x128xf32>,
    } else {
    }
    %c0 = arith.constant 0 : index
    %c0_1 = arith.constant 0 : index
    %3 = vector.load %arg8[%c0, %c0_1] : memref<8x128xf32, #tpu.memory_space<vmem>>, vector<8x128xf32>
    %c0_2 = arith.constant 0 : index
    %c0_3 = arith.constant 0 : index
    %4 = vector.load %arg5[%c0_2, %c0_3] : memref<128x128xf32, #tpu.memory_space<vmem>>, vector<128x128xf32>
    %cst = arith.constant dense<0.000000e+00> : vector<8x128xf32>
    %5 = tpu.matmul %3, %4, %cst {dimension_numbers = #tpu.dot_dimension_numbers<[1], [0], [0], [1], [0, 0, 1, 1], [], []>} : vector<8x128xf32>, vector<128x128xf32>, vector<8x128xf32> -> vector<8x128xf32>
    %c0_4 = arith.constant 0 : index
    %c0_5 = arith.constant 0 : index
    %6 = vector.load %arg6[%c0_4, %c0_5] : memref<1x128xf32, #tpu.memory_space<vmem>>, vector<1x128xf32>
    %7 = vector.broadcast %6 : vector<1x128xf32> to vector<8x128xf32>
    %8 = arith.addf %5, %7 : vector<8x128xf32>
    %c0_6 = arith.constant 0 : index
    %c0_7 = arith.constant 0 : index
    %9 = vector.load %arg7[%c0_6, %c0_7] : memref<8x128xf32, #tpu.memory_space<vmem>>, vector<8x128xf32>
    tpu.vector_store %arg7[%c0_6, %c0_7], %8 {strides = array<i32>} : memref<8x128xf32, #tpu.memory_space<vmem>>, vector<8x128xf32>,
    return
  }
  func.func @transform_0(%arg0: i32, %arg1: i32) -> (i32, i32) {
    %c0_i32 = arith.constant 0 : i32
    %c0_i32_0 = arith.constant 0 : i32
    return %arg0, %c0_i32 : i32, i32
  }
  func.func @transform_1(%arg0: i32, %arg1: i32) -> (i32, i32) {
    %c0_i32 = arith.constant 0 : i32
    %c0_i32_0 = arith.constant 0 : i32
    %c0_i32_1 = arith.constant 0 : i32
    return %c0_i32, %c0_i32_0 : i32, i32
  }
  func.func @transform_2(%arg0: i32, %arg1: i32) -> (i32, i32) {
    %c0_i32 = arith.constant 0 : i32
    %c0_i32_0 = arith.constant 0 : i32
    %c0_i32_1 = arith.constant 0 : i32
    return %c0_i32, %c0_i32_0 : i32, i32
  }
  func.func @transform_3(%arg0: i32, %arg1: i32) -> (i32, i32) {
    %c0_i32 = arith.constant 0 : i32
    %c0_i32_0 = arith.constant 0 : i32
    return %c0_i32, %arg1 : i32, i32
  }
  func.func @transform_4(%arg0: i32, %arg1: i32) -> (i32, i32) {
    %c0_i32 = arith.constant 0 : i32
    %c0_i32_0 = arith.constant 0 : i32
    return %c0_i32, %arg1 : i32, i32
  }
  func.func @transform_5(%arg0: i32, %arg1: i32) -> (i32, i32) {
    %c0_i32 = arith.constant 0 : i32
    return %arg0, %arg1 : i32, i32
  }
}

</mosaic_0001>

<llo_original>
// kernel: decoder_forward.1
$region0: #{decoder_forward.1}
  #allocation0 [shape = 'u32[]', space=smem, size = 0x4, offset = 0x4, fixed_abs, tag = 'smem constant byte address 0x4 - core index']
  #allocation1 [shape = 'u32[144,128]{1,0:T(1,128)}', space=vmem, size = 0x12000, scoped, tag = 'internal scratch']
  #allocation2 [shape = 'f32[8,128]{1,0:T(8,128)}', space=vmem, size = 0x1000, scoped, tag = 'scratch operand']
  %s0 = inlined_call_operand.vmem [shape: f32[8,128], index: 0, kind: input, shape index: {}]
  %s1 = inlined_call_operand.hbm [shape: f32[128,128], index: 1, kind: input, shape index: {}]
  %s2 = inlined_call_operand.vmem [shape: f32[1,128], index: 2, kind: input, shape index: {}]
  %s3 = inlined_call_operand.hbm [shape: f32[128,128], index: 3, kind: input, shape index: {}]
  %s4 = inlined_call_operand.vmem [shape: f32[1,128], index: 4, kind: input, shape index: {}]
  %s5 = inlined_call_operand.hbm [shape: f32[8,128], index: 5, kind: output, shape index: {}]
  %s6 = sld [smem:[#allocation0]]
  $region42: #{decoder_forward.1} parent=0
    _
  %s8 = ssub.s32 1, %s6
  %s9 = scalar_select 0, %s8, %s6
  $region1: #{decoder_forward.1} parent=0
    #allocation3 [shape = 'u8[65536]{0}', space=vmem, size = 0x10000, scoped, tag = 'input window, operand 1, single buffered']
    #allocation4 [shape = 's32[1]{0}', space=sflag, size = 0x4, scoped, tag = 'scoped memory for decoder_forward.1']
    #allocation5 [shape = 's32[1]{0}', space=sflag, size = 0x4, scoped, tag = 'scoped memory for decoder_forward.1']
    #allocation6 [shape = 'u8[65536]{0}', space=vmem, size = 0x10000, scoped, tag = 'input window, operand 3, single buffered']
    #allocation7 [shape = 's32[1]{0}', space=sflag, size = 0x4, scoped, tag = 'scoped memory for decoder_forward.1']
    #allocation8 [shape = 'u8[4096]{0}', space=vmem, size = 0x1000, scoped, tag = 'output window, operand 0, single buffered']
    %10 = vsyncpa [#allocation4], 0
    %11 = vsyncpa [#allocation7], 0
    %12 = vsyncpa [#allocation5], 0
    // Predicated region
    $region2: #{decoder_forward.1} parent=1 // pred_check
      _
    $region3: #{decoder_forward.1} parent=1 // pred_check_branch
      %14 = sbr.rel (0) target = $region5
    $region4: #{decoder_forward.1} parent=1 // pred_region
      _
    $region5: #{decoder_forward.1} parent=1 // pred_fallthru
      _
    // Predicated region
    $region6: #{decoder_forward.1} parent=1 // pred_check
      _
    $region7: #{decoder_forward.1} parent=1 // pred_check_branch
      %16 = sbr.rel (0) target = $region9
    $region8: #{decoder_forward.1} parent=1 // pred_region
      %s18 = ssub.s32 2048, 2048
      %19 = vsyncadd [#allocation4], %s18
      %s20 = sshll.u32 [#allocation3], 4
      %s21 = int_to_ptr.vmem [resolvable:$true] %s20
      %26 = dma.hbm_to_vmem [thread:$0]  %s1, 2048, %s21, [#allocation4], 128, 128, 8
    $region9: #{decoder_forward.1} parent=1 // pred_fallthru
      _
    // Predicated region
    $region10: #{decoder_forward.1} parent=1 // pred_check
      _
    $region11: #{decoder_forward.1} parent=1 // pred_check_branch
      %28 = sbr.rel (0) target = $region13
    $region12: #{decoder_forward.1} parent=1 // pred_region
      _
    $region13: #{decoder_forward.1} parent=1 // pred_fallthru
      _
    // Predicated region
    $region14: #{decoder_forward.1} parent=1 // pred_check
      _
    $region15: #{decoder_forward.1} parent=1 // pred_check_branch
      %30 = sbr.rel (0) target = $region17
    $region16: #{decoder_forward.1} parent=1 // pred_region
      %s32 = ssub.s32 2048, 2048
      %33 = vsyncadd [#allocation7], %s32
      %s34 = sshll.u32 [#allocation6], 4
      %s35 = int_to_ptr.vmem [resolvable:$true] %s34
      %40 = dma.hbm_to_vmem [thread:$0]  %s3, 2048, %s35, [#allocation7], 128, 128, 8
    $region17: #{decoder_forward.1} parent=1 // pred_fallthru
      _
    // Predicated region
    $region18: #{decoder_forward.1} parent=1 // pred_check
      _
    $region19: #{decoder_forward.1} parent=1 // pred_check_branch
      %42 = sbr.rel (0) target = $region21
    $region20: #{decoder_forward.1} parent=1 // pred_region
      _
    $region21: #{decoder_forward.1} parent=1 // pred_fallthru
      _
    // Predicated region
    $region22: #{decoder_forward.1} parent=1 // pred_check
      _
    $region23: #{decoder_forward.1} parent=1 // pred_check_branch
      %44 = sbr.rel (0) target = $region25
    $region24: #{decoder_forward.1} parent=1 // pred_region
      %45 = dma.done [#allocation4], 2048
    $region25: #{decoder_forward.1} parent=1 // pred_fallthru
      _
    // Predicated region
    $region26: #{decoder_forward.1} parent=1 // pred_check
      _
    $region27: #{decoder_forward.1} parent=1 // pred_check_branch
      %47 = sbr.rel (0) target = $region29
    $region28: #{decoder_forward.1} parent=1 // pred_region
      %48 = dma.done [#allocation7], 2048
    $region29: #{decoder_forward.1} parent=1 // pred_fallthru
      _
    %p49 = scmp.eq.s32.totalorder 0, 0
    // Predicated region
    $region30: #{decoder_forward.1} parent=1 // pred_check
      %p50 = pneg %p49
    $region31: #{decoder_forward.1} parent=1 // pred_check_branch
      %52 = sbr.rel (%p50) target = $region33
    $region32: #{decoder_forward.1} parent=1 // pred_region
      %v53 = vld [vmem:[%s0] sm:$0xff]
      %v54 = vld [vmem:[#allocation3] sm:$0xff]
      %v55 = vld [vmem:[#allocation3 + $0x8] sm:$0xff]
      %v56 = vld [vmem:[#allocation3 + $0x10] sm:$0xff]
      %v57 = vld [vmem:[#allocation3 + $0x18] sm:$0xff]
      %v58 = vld [vmem:[#allocation3 + $0x20] sm:$0xff]
      %v59 = vld [vmem:[#allocation3 + $0x28] sm:$0xff]
      %v60 = vld [vmem:[#allocation3 + $0x30] sm:$0xff]
      %v61 = vld [vmem:[#allocation3 + $0x38] sm:$0xff]
      %v62 = vld [vmem:[#allocation3 + $0x40] sm:$0xff]
      %v63 = vld [vmem:[#allocation3 + $0x48] sm:$0xff]
      %v64 = vld [vmem:[#allocation3 + $0x50] sm:$0xff]
      %v65 = vld [vmem:[#allocation3 + $0x58] sm:$0xff]
      %v66 = vld [vmem:[#allocation3 + $0x60] sm:$0xff]
      %v67 = vld [vmem:[#allocation3 + $0x68] sm:$0xff]
      %v68 = vld [vmem:[#allocation3 + $0x70] sm:$0xff]
      %v69 = vld [vmem:[#allocation3 + $0x78] sm:$0xff]
      %v70 = vld [vmem:[%s2] sm:$0x1]
      %v72 = vlaneseq
      %v73 = vshrl.u32 %v72, 7
      %v74 = vsub.s32 0, %v73
      %v75 = vrot.slane %v70, %v74
      %77 = vmatprep.subr.mxu0 0.0
      %78 = vmatpush1.msra.mxu0 %v54
      %79 = vmatprep.subr.mxu0 0.0
      %80 = vmatpush1.msra.mxu0 %v55
      %81 = vmatprep.subr.mxu0 0.0
      %82 = vmatpush1.msra.mxu0 %v56
      %83 = vmatprep.subr.mxu0 0.0
      %84 = vmatpush1.msra.mxu0 %v57
      %85 = vmatprep.subr.mxu0 0.0
      %86 = vmatpush1.msra.mxu0 %v58
      %87 = vmatprep.subr.mxu0 0.0
      %88 = vmatpush1.msra.mxu0 %v59
      %89 = vmatprep.subr.mxu0 0.0
      %90 = vmatpush1.msra.mxu0 %v60
      %91 = vmatprep.subr.mxu0 0.0
      %92 = vmatpush1.msra.mxu0 %v61
      %93 = vmatprep.subr.mxu0 0.0
      %94 = vmatpush1.msra.mxu0 %v62
      %95 = vmatprep.subr.mxu0 0.0
      %96 = vmatpush1.msra.mxu0 %v63
      %97 = vmatprep.subr.mxu0 0.0
      %98 = vmatpush1.msra.mxu0 %v64
      %99 = vmatprep.subr.mxu0 0.0
      %100 = vmatpush1.msra.mxu0 %v65
      %101 = vmatprep.subr.mxu0 0.0
      %102 = vmatpush1.msra.mxu0 %v66
      %103 = vmatprep.subr.mxu0 0.0
      %104 = vmatpush1.msra.mxu0 %v67
      %105 = vmatprep.subr.mxu0 0.0
      %106 = vmatpush1.msra.mxu0 %v68
      %107 = vmatprep.subr.mxu0 0.0
      %108 = vmatpush1.msra.mxu0 %v69
      %109 = vmatprep.subr.mxu0 0.0
      %110 = vmatpush1.msra.mxu0 0.0
      %111 = vmatprep.subr.mxu0 0.0
      %112 = vmatpush1.msra.mxu0 0.0
      %113 = vmatprep.subr.mxu0 0.0
      %114 = vmatpush1.msra.mxu0 0.0
      %115 = vmatprep.subr.mxu0 0.0
      %116 = vmatpush1.msra.mxu0 0.0
      %117 = vmatprep.subr.mxu0 0.0
      %118 = vmatpush1.msra.mxu0 0.0
      %119 = vmatprep.subr.mxu0 0.0
      %120 = vmatpush1.msra.mxu0 0.0
      %121 = vmatprep.subr.mxu0 0.0
      %122 = vmatpush1.msra.mxu0 0.0
      %123 = vmatprep.subr.mxu0 0.0
      %124 = vmatpush1.msra.mxu0 0.0
      %125 = vmatprep.subr.mxu0 0.0
      %126 = vmatpush1.msra.mxu0 0.0
      %127 = vmatprep.subr.mxu0 0.0
      %128 = vmatpush1.msra.mxu0 0.0
      %129 = vmatprep.subr.mxu0 0.0
      %130 = vmatpush1.msra.mxu0 0.0
      %131 = vmatprep.subr.mxu0 0.0
      %132 = vmatpush1.msra.mxu0 0.0
      %133 = vmatprep.subr.mxu0 0.0
      %134 = vmatpush1.msra.mxu0 0.0
      %135 = vmatprep.subr.mxu0 0.0
      %136 = vmatpush1.msra.mxu0 0.0
      %137 = vmatprep.subr.mxu0 0.0
      %138 = vmatpush1.msra.mxu0 0.0
      %139 = vmatprep.subr.mxu0 0.0
      %140 = vmatpush1.msra.mxu0 0.0
      %141 = vmatprep.mubr.f32.mxu0 0.0
      %142 = vmatmul.mubr.f32.gmra.mrb[0].mxu0 %v53
      %v143 = vpop.f32.mrb[0].mxu0
      %v144 = vadd.f32 %v75, %v143
      %v145 = vpop.f32.mrb[0].mxu0
      %146 = vdwg.mxu0
      %v147 = vmax.f32 %v144, 0.0
      %148 = vst [vmem:[#allocation2] sm:$0xff] %v147
    $region33: #{decoder_forward.1} parent=1 // pred_fallthru
      _
    %v149 = vld [vmem:[#allocation2] sm:$0xff]
    %v150 = vld [vmem:[#allocation6] sm:$0xff]
    %v151 = vld [vmem:[#allocation6 + $0x8] sm:$0xff]
    %v152 = vld [vmem:[#allocation6 + $0x10] sm:$0xff]
    %v153 = vld [vmem:[#allocation6 + $0x18] sm:$0xff]
    %v154 = vld [vmem:[#allocation6 + $0x20] sm:$0xff]
    %v155 = vld [vmem:[#allocation6 + $0x28] sm:$0xff]
    %v156 = vld [vmem:[#allocation6 + $0x30] sm:$0xff]
    %v157 = vld [vmem:[#allocation6 + $0x38] sm:$0xff]
    %v158 = vld [vmem:[#allocation6 + $0x40] sm:$0xff]
    %v159 = vld [vmem:[#allocation6 + $0x48] sm:$0xff]
    %v160 = vld [vmem:[#allocation6 + $0x50] sm:$0xff]
    %v161 = vld [vmem:[#allocation6 + $0x58] sm:$0xff]
    %v162 = vld [vmem:[#allocation6 + $0x60] sm:$0xff]
    %v163 = vld [vmem:[#allocation6 + $0x68] sm:$0xff]
    %v164 = vld [vmem:[#allocation6 + $0x70] sm:$0xff]
    %v165 = vld [vmem:[#allocation6 + $0x78] sm:$0xff]
    %v166 = vld [vmem:[%s4] sm:$0x1]
    %v168 = vlaneseq
    %v169 = vshrl.u32 %v168, 7
    %v170 = vsub.s32 0, %v169
    %v171 = vrot.slane %v166, %v170
    %173 = vmatprep.subr.mxu0 0.0
    %174 = vmatpush1.msra.mxu0 %v150
    %175 = vmatprep.subr.mxu0 0.0
    %176 = vmatpush1.msra.mxu0 %v151
    %177 = vmatprep.subr.mxu0 0.0
    %178 = vmatpush1.msra.mxu0 %v152
    %179 = vmatprep.subr.mxu0 0.0
    %180 = vmatpush1.msra.mxu0 %v153
    %181 = vmatprep.subr.mxu0 0.0
    %182 = vmatpush1.msra.mxu0 %v154
    %183 = vmatprep.subr.mxu0 0.0
    %184 = vmatpush1.msra.mxu0 %v155
    %185 = vmatprep.subr.mxu0 0.0
    %186 = vmatpush1.msra.mxu0 %v156
    %187 = vmatprep.subr.mxu0 0.0
    %188 = vmatpush1.msra.mxu0 %v157
    %189 = vmatprep.subr.mxu0 0.0
    %190 = vmatpush1.msra.mxu0 %v158
    %191 = vmatprep.subr.mxu0 0.0
    %192 = vmatpush1.msra.mxu0 %v159
    %193 = vmatprep.subr.mxu0 0.0
    %194 = vmatpush1.msra.mxu0 %v160
    %195 = vmatprep.subr.mxu0 0.0
    %196 = vmatpush1.msra.mxu0 %v161
    %197 = vmatprep.subr.mxu0 0.0
    %198 = vmatpush1.msra.mxu0 %v162
    %199 = vmatprep.subr.mxu0 0.0
    %200 = vmatpush1.msra.mxu0 %v163
    %201 = vmatprep.subr.mxu0 0.0
    %202 = vmatpush1.msra.mxu0 %v164
    %203 = vmatprep.subr.mxu0 0.0
    %204 = vmatpush1.msra.mxu0 %v165
    %205 = vmatprep.subr.mxu0 0.0
    %206 = vmatpush1.msra.mxu0 0.0
    %207 = vmatprep.subr.mxu0 0.0
    %208 = vmatpush1.msra.mxu0 0.0
    %209 = vmatprep.subr.mxu0 0.0
    %210 = vmatpush1.msra.mxu0 0.0
    %211 = vmatprep.subr.mxu0 0.0
    %212 = vmatpush1.msra.mxu0 0.0
    %213 = vmatprep.subr.mxu0 0.0
    %214 = vmatpush1.msra.mxu0 0.0
    %215 = vmatprep.subr.mxu0 0.0
    %216 = vmatpush1.msra.mxu0 0.0
    %217 = vmatprep.subr.mxu0 0.0
    %218 = vmatpush1.msra.mxu0 0.0
    %219 = vmatprep.subr.mxu0 0.0
    %220 = vmatpush1.msra.mxu0 0.0
    %221 = vmatprep.subr.mxu0 0.0
    %222 = vmatpush1.msra.mxu0 0.0
    %223 = vmatprep.subr.mxu0 0.0
    %224 = vmatpush1.msra.mxu0 0.0
    %225 = vmatprep.subr.mxu0 0.0
    %226 = vmatpush1.msra.mxu0 0.0
    %227 = vmatprep.subr.mxu0 0.0
    %228 = vmatpush1.msra.mxu0 0.0
    %229 = vmatprep.subr.mxu0 0.0
    %230 = vmatpush1.msra.mxu0 0.0
    %231 = vmatprep.subr.mxu0 0.0
    %232 = vmatpush1.msra.mxu0 0.0
    %233 = vmatprep.subr.mxu0 0.0
    %234 = vmatpush1.msra.mxu0 0.0
    %235 = vmatprep.subr.mxu0 0.0
    %236 = vmatpush1.msra.mxu0 0.0
    %237 = vmatprep.mubr.f32.mxu0 0.0
    %238 = vmatmul.mubr.f32.gmra.mrb[0].mxu0 %v149
    %v239 = vpop.f32.mrb[0].mxu0
    %v240 = vadd.f32 %v171, %v239
    %v241 = vpop.f32.mrb[0].mxu0
    %242 = vdwg.mxu0
    %243 = vst [vmem:[#allocation8] sm:$0xff] %v240
    // Predicated region
    $region34: #{decoder_forward.1} parent=1 // pred_check
      _
    $region35: #{decoder_forward.1} parent=1 // pred_check_branch
      %245 = sbr.rel (0) target = $region37
    $region36: #{decoder_forward.1} parent=1 // pred_region
      %s247 = ssub.s32 128, 128
      %248 = vsyncadd [#allocation5], %s247
      %s250 = sshll.u32 [#allocation8], 4
      %s251 = int_to_ptr.vmem [resolvable:$true] %s250
      %253 = dma.vmem_to_hbm [thread:$0]  %s251, 128, %s5, [#allocation5]
    $region37: #{decoder_forward.1} parent=1 // pred_fallthru
      _
    // Predicated region
    $region38: #{decoder_forward.1} parent=1 // pred_check
      _
    $region39: #{decoder_forward.1} parent=1 // pred_check_branch
      %255 = sbr.rel (0) target = $region41
    $region40: #{decoder_forward.1} parent=1 // pred_region
      %256 = dma.done [#allocation5], 128
    $region41: #{decoder_forward.1} parent=1 // pred_fallthru
      _
    %257 = vsyncpa [#allocation4], 1
    %258 = vsyncpa [#allocation7], 1
    %259 = vsyncpa [#allocation5], 1

</llo_original>
